<compile_context>
chip_gen: v6e
topology: v6e:2x2x1
jax: 0.10.0
libtpu: 0.0.40
codegen_flags: <defaults>
</compile_context>

<pallas_src>
import math

import jax
import jax.numpy as jnp
from jax.experimental import pallas as pl
from jax.experimental.pallas import tpu as pltpu

_LANE = 128
_TARGET_BLOCK_BYTES = 4 * 1024 * 1024   # ~4 MiB of *input* per grid step
_VMEM_LIMIT_BYTES = 32 * 1024 * 1024    # safe scoped-VMEM budget on v5e/v6e/v7x


def _silu_kernel(x_ref, o_ref):
    # input * sigmoid(input.float()); exact sigmoid (EUP has slack, HBM binds).
    x = x_ref[...]
    sig = jax.nn.sigmoid(x.astype(jnp.float32))
    o_ref[...] = (x * sig).astype(o_ref.dtype)


def _min_sublane(itemsize):
    # Minimum second-minor tile: (8,128) f32, (16,128) bf16/f16, (32,128) int8.
    return max(8, 32 // max(int(itemsize), 1))


def _round_up(a, b):
    return pl.cdiv(a, b) * b


def _pick_block_rows(rows, row_bytes, sublane):
    """Rows per block: ~_TARGET_BLOCK_BYTES of input, sublane-aligned, and split
    into >=2 grid steps whenever possible (megacore sharding on v7x)."""
    if rows <= sublane:
        return rows  # full-extent block, single grid step (tiny input)
    target = max(sublane,
                 (_TARGET_BLOCK_BYTES // max(row_bytes, 1)) // sublane * sublane)
    if target >= rows:
        # Whole input fits one target block -> split across two steps instead.
        return max(sublane, _round_up(pl.cdiv(rows, 2), sublane))
    return target


def _run_silu_2d(x2d, out_dtype, block_rows):
    rows, cols = x2d.shape
    n_elems = rows * cols
    in_bytes = n_elems * jnp.dtype(x2d.dtype).itemsize
    out_bytes = n_elems * jnp.dtype(out_dtype).itemsize
    grid = (pl.cdiv(rows, block_rows),)
    return pl.pallas_call(
        _silu_kernel,
        out_shape=jax.ShapeDtypeStruct((rows, cols), out_dtype),
        grid_spec=pltpu.PrefetchScalarGridSpec(
            num_scalar_prefetch=0,
            grid=grid,
            in_specs=[pl.BlockSpec((block_rows, cols), lambda i: (i, 0))],
            out_specs=pl.BlockSpec((block_rows, cols), lambda i: (i, 0)),
        ),
        compiler_params=pltpu.CompilerParams(
            dimension_semantics=("parallel",),
            vmem_limit_bytes=_VMEM_LIMIT_BYTES,
        ),
        cost_estimate=pl.CostEstimate(
            flops=5 * n_elems,
            transcendentals=n_elems,
            bytes_accessed=in_bytes + out_bytes,
        ),
    )(x2d)


def silu_pallas(x):
    """out = input * sigmoid(input.float()); dtype = promote(input.dtype, f32)."""
    out_dtype = jnp.promote_types(x.dtype, jnp.float32)
    orig_shape = x.shape
    n = x.size
    if n == 0:
        return jnp.zeros(orig_shape, out_dtype)

    itemsize = jnp.dtype(x.dtype).itemsize
    out_itemsize = jnp.dtype(out_dtype).itemsize
    sublane = _min_sublane(itemsize)

    # Fast path: widest lane width (multiple of 128) that exactly divides n.
    # No padding, no trailing slice; lane-dense unmasked stores.
    lane_width = None
    for w in (4096, 2048, 1024, 512, 256, 128):
        if n % w == 0:
            lane_width = w
            break

    if lane_width is not None:
        rows = n // lane_width
        block_rows = _pick_block_rows(rows, lane_width * itemsize, sublane)
        x2d = jnp.ravel(x).reshape(rows, lane_width)
        out2d = _run_silu_2d(x2d, out_dtype, block_rows)
        return out2d.reshape(orig_shape)

    # Ragged path (n not a multiple of 128): collapse to (prod(leading), last).
    # Full-extent last dim + pipeline-clipped partial edge block => still zero
    # extra HBM passes (stores are lane-masked if last dim < 128).
    if x.ndim >= 2:
        rows = math.prod(orig_shape[:-1])
        cols = orig_shape[-1]
    else:
        rows, cols = 1, n
    cols_pad = _round_up(cols, _LANE)                      # VMEM footprint of a row
    row_vmem = cols_pad * (itemsize + out_itemsize)
    if sublane * row_vmem * 2 * 2 <= _VMEM_LIMIT_BYTES:    # in+out, double-buffered
        block_rows = _pick_block_rows(rows, cols_pad * itemsize, sublane)
        max_rows = max(sublane,
                       (_VMEM_LIMIT_BYTES // (2 * 2 * row_vmem)) // sublane * sublane)
        block_rows = min(block_rows, max_rows)
        x2d = jnp.ravel(x).reshape(rows, cols)
        out2d = _run_silu_2d(x2d, out_dtype, block_rows)
        return out2d.reshape(orig_shape)

    # Last resort (huge, non-128-divisible last dim): minimal pad to one lane
    # multiple + trailing slice.
    # TODO(synk): replace with an in-kernel masked tail store (scalar-prefetch
    # the valid count) to drop the extra pad/slice HBM passes.
    rows = pl.cdiv(n, _LANE)
    n_slab = rows * _LANE
    x2d = jnp.pad(jnp.ravel(x), (0, n_slab - n)).reshape(rows, _LANE)
    block_rows = _pick_block_rows(rows, _LANE * itemsize, sublane)
    out2d = _run_silu_2d(x2d, out_dtype, block_rows)
    return out2d.reshape(-1)[:n].reshape(orig_shape)


if __name__ == "__main__":
    key = jax.random.PRNGKey(0)

    # Small NCHW-shaped input (conv-activation usage).
    x = jax.random.normal(key, (2, 4, 16, 16), dtype=jnp.float32)
    out = silu_pallas(x)
    jax.block_until_ready(out)
    ref = x * jax.nn.sigmoid(x.astype(jnp.float32))
    assert out.shape == x.shape
    assert out.dtype == jnp.promote_types(x.dtype, jnp.float32)
    assert jnp.allclose(out, ref, atol=1e-6, rtol=1e-6)

    # Ragged size (n % 128 != 0) -> collapsed-2D path, no pad / no slice.
    x2 = jax.random.normal(jax.random.PRNGKey(1), (3, 5, 17, 31), dtype=jnp.float32)
    out2 = silu_pallas(x2)
    jax.block_until_ready(out2)
    ref2 = x2 * jax.nn.sigmoid(x2.astype(jnp.float32))
    assert out2.shape == x2.shape
    assert jnp.allclose(out2, ref2, atol=1e-6, rtol=1e-6)

    # bf16 input -> dtype-aware block sizing; output promoted to f32 per module.
    x3 = jax.random.normal(jax.random.PRNGKey(2), (4, 64, 128), dtype=jnp.bfloat16)
    out3 = silu_pallas(x3)
    jax.block_until_ready(out3)
    x3f = x3.astype(jnp.float32)
    ref3 = x3f * jax.nn.sigmoid(x3f)
    assert out3.dtype == jnp.float32
    assert jnp.allclose(out3, ref3, atol=1e-6, rtol=1e-6)

    print("KERNEL_OK")
</pallas_src>

<mosaic_0001>
module attributes {stable_mosaic.version = 11 : i64} {
  func.func @_silu_kernel(%arg0: i32, %arg1: memref<1x2048xf32, #tpu.memory_space<vmem>>, %arg2: memref<1x2048xf32, #tpu.memory_space<vmem>>) attributes {dimension_semantics = [#tpu.dimension_semantics<parallel>], iteration_bounds = array<i64: 1>, scalar_prefetch = 0 : i64, scratch_operands = 0 : i64, tpu.core_type = #tpu.core_type<tc>, window_params = [{transform_indices = @transform_0, window_bounds = array<i64: 1, 2048>}, {transform_indices = @transform_1, window_bounds = array<i64: 1, 2048>}]} {
    %c0 = arith.constant 0 : index
    %c0_0 = arith.constant 0 : index
    %0 = vector.load %arg1[%c0, %c0_0] : memref<1x2048xf32, #tpu.memory_space<vmem>>, vector<1x2048xf32>
    %1 = arith.negf %0 : vector<1x2048xf32>
    %2 = math.exp %1 : vector<1x2048xf32>
    %cst = arith.constant 1.000000e+00 : f32
    %3 = vector.broadcast %cst : f32 to vector<1x2048xf32>
    %4 = arith.addf %3, %2 : vector<1x2048xf32>
    %5 = arith.divf %3, %4 : vector<1x2048xf32>
    %6 = arith.mulf %0, %5 : vector<1x2048xf32>
    %c0_1 = arith.constant 0 : index
    %c0_2 = arith.constant 0 : index
    %7 = vector.load %arg2[%c0_1, %c0_2] : memref<1x2048xf32, #tpu.memory_space<vmem>>, vector<1x2048xf32>
    tpu.vector_store %arg2[%c0_1, %c0_2], %6 {strides = array<i32>} : memref<1x2048xf32, #tpu.memory_space<vmem>>, vector<1x2048xf32>,
    return
  }
  func.func @transform_0(%arg0: i32) -> (i32, i32) {
    %c0_i32 = arith.constant 0 : i32
    %c0_i32_0 = arith.constant 0 : i32
    return %arg0, %c0_i32 : i32, i32
  }
  func.func @transform_1(%arg0: i32) -> (i32, i32) {
    %c0_i32 = arith.constant 0 : i32
    %c0_i32_0 = arith.constant 0 : i32
    return %arg0, %c0_i32 : i32, i32
  }
}

</mosaic_0001>

<llo_original>
// kernel: tpu_custom_call.1
$region0: #{tpu_custom_call.1}
  #allocation0 [shape = 'u32[]', space=smem, size = 0x4, offset = 0x4, fixed_abs, tag = 'smem constant byte address 0x4 - core index']
  #allocation1 [shape = 'u32[144,128]{1,0:T(1,128)}', space=vmem, size = 0x12000, scoped, tag = 'internal scratch']
  %s0 = inlined_call_operand.hbm [shape: f32[1,2048], index: 0, kind: input, shape index: {}]
  %s1 = inlined_call_operand.hbm [shape: f32[1,2048], index: 1, kind: output, shape index: {}]
  %s2 = sld [smem:[#allocation0]]
  $region18: #{tpu_custom_call.1} parent=0
    _
  %s4 = ssub.s32 1, %s2
  %s5 = scalar_select 0, %s4, %s2
  $region1: #{tpu_custom_call.1} parent=0
    #allocation2 [shape = 'u8[8192]{0}', space=vmem, size = 0x2000, scoped, tag = 'input window, operand 0, single buffered']
    #allocation3 [shape = 's32[1]{0}', space=sflag, size = 0x4, scoped, tag = 'scoped memory for tpu_custom_call.1']
    #allocation4 [shape = 's32[1]{0}', space=sflag, size = 0x4, scoped, tag = 'scoped memory for tpu_custom_call.1']
    #allocation5 [shape = 'u8[8192]{0}', space=vmem, size = 0x2000, scoped, tag = 'output window, operand 0, single buffered']
    %6 = vsyncpa [#allocation3], 0
    %7 = vsyncpa [#allocation4], 0
    // Predicated region
    $region2: #{tpu_custom_call.1} parent=1 // pred_check
      _
    $region3: #{tpu_custom_call.1} parent=1 // pred_check_branch
      %9 = sbr.rel (0) target = $region5
    $region4: #{tpu_custom_call.1} parent=1 // pred_region
      %s11 = ssub.s32 256, 256
      %12 = vsyncadd [#allocation3], %s11
      %s14 = sshll.u32 [#allocation2], 4
      %s15 = int_to_ptr.vmem [resolvable:$true] %s14
      %17 = dma.hbm_to_vmem [thread:$0]  %s0, 256, %s15, [#allocation3]
    $region5: #{tpu_custom_call.1} parent=1 // pred_fallthru
      _
    // Predicated region
    $region6: #{tpu_custom_call.1} parent=1 // pred_check
      _
    $region7: #{tpu_custom_call.1} parent=1 // pred_check_branch
      %19 = sbr.rel (0) target = $region9
    $region8: #{tpu_custom_call.1} parent=1 // pred_region
      %20 = dma.done [#allocation3], 256
    $region9: #{tpu_custom_call.1} parent=1 // pred_fallthru
      _
    %v21 = vld [vmem:[#allocation2] sm:$0xff]
    %v22 = vld [vmem:[#allocation2 + $0x8] sm:$0xff]
    %v23 = vxor.u32 %v21, 2147483648
    %v24 = vxor.u32 %v22, 2147483648
    %v25 = vmul.f32 %v23, 1.442695
    %v26 = vpow.pop %v25
    %v27 = vmul.f32 %v24, 1.442695
    %v28 = vpow.pop %v27
    %v29 = vadd.f32 %v26, 1.0
    %v30 = vadd.f32 %v28, 1.0
    %v31 = vrcp.pop %v29
    %v32 = vmul.f32 1.0, %v31
    %v33 = vrcp.pop %v30
    %v34 = vmul.f32 1.0, %v33
    %v35 = vmul.f32 %v21, %v32
    %v36 = vmul.f32 %v22, %v34
    %37 = vst [vmem:[#allocation5] sm:$0xff] %v35
    %38 = vst [vmem:[#allocation5 + $0x8] sm:$0xff] %v36
    // Predicated region
    $region10: #{tpu_custom_call.1} parent=1 // pred_check
      _
    $region11: #{tpu_custom_call.1} parent=1 // pred_check_branch
      %40 = sbr.rel (0) target = $region13
    $region12: #{tpu_custom_call.1} parent=1 // pred_region
      %s42 = ssub.s32 256, 256
      %43 = vsyncadd [#allocation4], %s42
      %s45 = sshll.u32 [#allocation5], 4
      %s46 = int_to_ptr.vmem [resolvable:$true] %s45
      %48 = dma.vmem_to_hbm [thread:$0]  %s46, 256, %s1, [#allocation4]
    $region13: #{tpu_custom_call.1} parent=1 // pred_fallthru
      _
    // Predicated region
    $region14: #{tpu_custom_call.1} parent=1 // pred_check
      _
    $region15: #{tpu_custom_call.1} parent=1 // pred_check_branch
      %50 = sbr.rel (0) target = $region17
    $region16: #{tpu_custom_call.1} parent=1 // pred_region
      %51 = dma.done [#allocation4], 256
    $region17: #{tpu_custom_call.1} parent=1 // pred_fallthru
      _
    %52 = vsyncpa [#allocation3], 1
    %53 = vsyncpa [#allocation4], 1

</llo_original>
